<compile_context>
chip_gen: v7x
topology: tpu7x:2x2x1
jax: 0.10.0
libtpu: 0.0.40
codegen_flags: <defaults>
</compile_context>

<pallas_src>
import jax
import jax.numpy as jnp
from jax.experimental import pallas as pl
from jax.experimental.pallas import tpu as pltpu


def _round_up(x, m):
    return ((x + m - 1) // m) * m


# ----------------------------------------------------------------------------
# Pallas kernel: out = W_eff_feat @ feat + table3[:, phoneme_id] + bias
# (pre + identity-encoder + post folded into a single (3, C) weight on host)
# ----------------------------------------------------------------------------
def _predictor_kernel(feat_ref, ids_ref, bias_ref, w_feat_ref, table3_ref, out_ref):
    f32 = jnp.float32
    # feat block is (1, C_feat, T): channels on sublanes, time on lanes.
    out = jnp.dot(w_feat_ref[...], feat_ref[0], preferred_element_type=f32)     # (3, T)

    # In-kernel phoneme-embedding gather via one-hot matmul against the tiny
    # folded (3, phoneme_size) table (only 4 B/timestep of id traffic).
    ids = ids_ref[0]                                                            # (1, T) int32
    psize = table3_ref.shape[1]
    iota = jax.lax.broadcasted_iota(jnp.int32, (psize, ids.shape[-1]), 0)       # (P, T)
    one_hot = (iota == ids).astype(table3_ref.dtype)                            # (P, T)
    out = out + jnp.dot(table3_ref[...], one_hot, preferred_element_type=f32)   # (3, T)

    # TODO(synk): yukarin_sosfd Encoder source not provided; identity placeholder
    #             (the non-pad mask and cond=t therefore have no effect here).
    out = out + bias_ref[0]                     # (3, 1): speaker + pre/post bias
    out_ref[0] = out.astype(out_ref.dtype)


def predictor_core(feat, ids, bias_col, w_feat, table3, *, tile_l):
    """feat: (B, C_feat, L_pad) bf16, ids: (B, 1, L_pad) i32 -> (B, 3, L_pad) f32."""
    B, c_feat, L = feat.shape
    psize = table3.shape[1]
    grid = (B, L // tile_l)

    return pl.pallas_call(
        _predictor_kernel,
        out_shape=jax.ShapeDtypeStruct((B, 3, L), jnp.float32),
        grid=grid,
        in_specs=[
            pl.BlockSpec((1, c_feat, tile_l), lambda b, i: (b, 0, i)),   # features
            pl.BlockSpec((1, 1, tile_l), lambda b, i: (b, 0, i)),        # phoneme ids
            pl.BlockSpec((1, 3, 1), lambda b, i: (b, 0, 0)),             # per-batch bias
            pl.BlockSpec((3, c_feat), lambda b, i: (0, 0)),              # folded feat weight
            pl.BlockSpec((3, psize), lambda b, i: (0, 0)),               # folded phoneme table
        ],
        out_specs=pl.BlockSpec((1, 3, tile_l), lambda b, i: (b, 0, i)),
        compiler_params=pltpu.CompilerParams(
            dimension_semantics=("parallel", "parallel")),
    )(feat, ids, bias_col, w_feat, table3)


# ----------------------------------------------------------------------------
# Plain-JAX glue reproducing Predictor.forward semantics (ragged lists etc.)
# ----------------------------------------------------------------------------
def init_params(key, speaker_size, speaker_embedding_size, phoneme_size,
                phoneme_embedding_size, hidden_size):
    input_size = 1 + 1 + 1 + 4 + phoneme_embedding_size + speaker_embedding_size + 1 + 1 + 1
    output_size = 1 + 1 + 1
    ks = jax.random.split(key, 6)
    return {
        "speaker_embedder": jax.random.normal(ks[0], (speaker_size, speaker_embedding_size), jnp.float32),
        "phoneme_embedder": jax.random.normal(ks[1], (phoneme_size, phoneme_embedding_size), jnp.float32),
        "pre_w": jax.random.normal(ks[2], (input_size, hidden_size), jnp.float32) * 0.1,
        "pre_b": jax.random.normal(ks[3], (hidden_size,), jnp.float32) * 0.1,
        "post_w": jax.random.normal(ks[4], (hidden_size, output_size), jnp.float32) * 0.1,
        "post_b": jax.random.normal(ks[5], (output_size,), jnp.float32) * 0.1,
    }


def _pad_stack_channel_major(tensors, l_pad):
    """List of (L_i, C) -> (B, C, l_pad), zero-padded along time (lane axis)."""
    outs = []
    for t in tensors:
        tt = jnp.transpose(t)                                   # (C, L_i)
        outs.append(jnp.pad(tt, ((0, 0), (0, l_pad - t.shape[0]))))
    return jnp.stack(outs, axis=0)


def predictor_forward(params, lf0_list, vuv_list, vol_list, accent_list,
                      phoneme_list, speaker_id, lf0_t_list, vuv_t_list,
                      vol_t_list, *, tile_l=4096):
    length_list = [t.shape[0] for t in lf0_list]
    B = len(length_list)
    max_len = max(length_list)

    # Tile selection: big tiles (per-step overhead dominates), but keep >=2 grid
    # steps when B == 1 so both v7x TensorCores get work.
    if B == 1:
        tile_l = min(tile_l, max(128, _round_up((max_len + 1) // 2, 128)))
    tile_l = min(tile_l, _round_up(max_len, 128))
    l_pad = _round_up(max_len, tile_l)

    Pe = params["phoneme_embedder"].shape[1]
    Se = params["speaker_embedder"].shape[1]
    bf16 = jnp.bfloat16

    # Single channel-major bf16 feature slab: [lf0|vuv|vol|accent(4)|lf0_t|vuv_t|vol_t]
    feat = _pad_stack_channel_major(
        [jnp.concatenate([a, b, c, d, e, f, g], axis=1)
         for a, b, c, d, e, f, g in zip(lf0_list, vuv_list, vol_list, accent_list,
                                        lf0_t_list, vuv_t_list, vol_t_list)],
        l_pad).astype(bf16)                                                    # (B, 10, l_pad)

    ids = _pad_stack_channel_major(phoneme_list, l_pad).astype(jnp.int32)      # (B, 1, l_pad)

    # Fold pre + (identity encoder) + post in f32; cast only final weights to bf16.
    # pre_w row order: [lf0,vuv,vol | accent(4) | phoneme(Pe) | speaker(Se) | t(3)]
    pre_w, pre_b = params["pre_w"], params["pre_b"]
    post_w, post_b = params["post_w"], params["post_b"]
    w_eff = (pre_w @ post_w).T                                                 # (3, input_size) f32

    w_feat = jnp.concatenate(
        [w_eff[:, 0:7], w_eff[:, 7 + Pe + Se:7 + Pe + Se + 3]], axis=1).astype(bf16)   # (3, 10)
    table3 = (w_eff[:, 7:7 + Pe] @ params["phoneme_embedder"].T).astype(bf16)          # (3, P)

    spk_emb = params["speaker_embedder"][speaker_id]                           # (B, Se)
    bias = spk_emb @ w_eff[:, 7 + Pe:7 + Pe + Se].T + pre_b @ post_w + post_b  # (B, 3)
    bias_col = bias[:, :, None].astype(jnp.float32)                            # (B, 3, 1)

    out = predictor_core(feat, ids, bias_col, w_feat, table3, tile_l=tile_l)   # (B, 3, l_pad)

    return ([out[i, 0, :l] for i, l in enumerate(length_list)],
            [out[i, 1, :l] for i, l in enumerate(length_list)],
            [out[i, 2, :l] for i, l in enumerate(length_list)])


# ----------------------------------------------------------------------------
# Pure-JAX f32 reference (mirrors the PyTorch forward, encoder = identity)
# ----------------------------------------------------------------------------
def _reference_forward(params, lf0_list, vuv_list, vol_list, accent_list,
                       phoneme_list, speaker_id, lf0_t_list, vuv_t_list, vol_t_list):
    length_list = [t.shape[0] for t in lf0_list]
    max_len = max(length_list)

    def pad(ts):
        return jnp.stack(
            [jnp.pad(t, ((0, max_len - t.shape[0]), (0, 0))) for t in ts], axis=0)

    lf0, vuv, vol = pad(lf0_list), pad(vuv_list), pad(vol_list)
    accent = pad(accent_list)
    lf0_t, vuv_t, vol_t = pad(lf0_t_list), pad(vuv_t_list), pad(vol_t_list)
    ph_ids = pad(phoneme_list)[..., 0]
    phoneme = params["phoneme_embedder"][ph_ids]
    spk = params["speaker_embedder"][speaker_id]
    spk = jnp.broadcast_to(spk[:, None, :], (spk.shape[0], max_len, spk.shape[-1]))
    t = jnp.concatenate([lf0_t, vuv_t, vol_t], axis=2)
    h = jnp.concatenate([lf0, vuv, vol, accent, phoneme, spk, t], axis=2)
    h = h @ params["pre_w"] + params["pre_b"]
    out = h @ params["post_w"] + params["post_b"]
    return ([out[i, :l, 0] for i, l in enumerate(length_list)],
            [out[i, :l, 1] for i, l in enumerate(length_list)],
            [out[i, :l, 2] for i, l in enumerate(length_list)])


# ----------------------------------------------------------------------------
if __name__ == "__main__":
    speaker_size = 5
    speaker_embedding_size = 4
    phoneme_size = 10
    phoneme_embedding_size = 8
    hidden_size = 32

    key = jax.random.PRNGKey(0)
    pkey, dkey = jax.random.split(key)
    params = init_params(pkey, speaker_size, speaker_embedding_size,
                         phoneme_size, phoneme_embedding_size, hidden_size)

    # Variable-length batch: B=2 sequences with lengths 8 and 6.
    lengths = [8, 6]
    dkeys = jax.random.split(dkey, 20)
    ki = iter(dkeys)

    def rnd(shape):
        return jax.random.normal(next(ki), shape, jnp.float32)

    lf0_list = [rnd((l, 1)) for l in lengths]
    vuv_list = [rnd((l, 1)) for l in lengths]
    vol_list = [rnd((l, 1)) for l in lengths]
    accent_list = [rnd((l, 4)) for l in lengths]
    lf0_t_list = [rnd((l, 1)) for l in lengths]
    vuv_t_list = [rnd((l, 1)) for l in lengths]
    vol_t_list = [rnd((l, 1)) for l in lengths]
    phoneme_list = [
        jax.random.randint(next(ki), (l, 1), 0, phoneme_size, jnp.int32)
        for l in lengths
    ]
    speaker_id = jnp.array([1, 3], dtype=jnp.int32)

    out_lf0, out_vuv, out_vol = predictor_forward(
        params, lf0_list, vuv_list, vol_list, accent_list, phoneme_list,
        speaker_id, lf0_t_list, vuv_t_list, vol_t_list)

    for o in (out_lf0 + out_vuv + out_vol):
        jax.block_until_ready(o)

    # sanity: output lengths match the ragged input lengths
    assert [o.shape[0] for o in out_lf0] == lengths
    assert [o.shape[0] for o in out_vuv] == lengths
    assert [o.shape[0] for o in out_vol] == lengths

    # numerical check against a pure f32 JAX reference (bf16 inputs -> loose tol)
    ref_lf0, ref_vuv, ref_vol = _reference_forward(
        params, lf0_list, vuv_list, vol_list, accent_list, phoneme_list,
        speaker_id, lf0_t_list, vuv_t_list, vol_t_list)
    for a, b in zip(out_lf0 + out_vuv + out_vol, ref_lf0 + ref_vuv + ref_vol):
        assert float(jnp.max(jnp.abs(a - b))) < 5e-2

    print("KERNEL_OK")
</pallas_src>

<mosaic_0001>
module attributes {stable_mosaic.version = 11 : i64} {
  func.func @_predictor_kernel(%arg0: i32, %arg1: i32, %arg2: memref<1x10x128xbf16, #tpu.memory_space<vmem>>, %arg3: memref<1x1x128xi32, #tpu.memory_space<vmem>>, %arg4: memref<1x3x1xf32, #tpu.memory_space<vmem>>, %arg5: memref<3x10xbf16, #tpu.memory_space<vmem>>, %arg6: memref<3x10xbf16, #tpu.memory_space<vmem>>, %arg7: memref<1x3x128xf32, #tpu.memory_space<vmem>>) attributes {dimension_semantics = [#tpu.dimension_semantics<parallel>, #tpu.dimension_semantics<parallel>], iteration_bounds = array<i64: 2, 1>, scalar_prefetch = 0 : i64, scratch_operands = 0 : i64, tpu.core_type = #tpu.core_type<tc>, window_params = [{transform_indices = @transform_0, window_bounds = array<i64: 1, 10, 128>}, {transform_indices = @transform_1, window_bounds = array<i64: 1, 1, 128>}, {transform_indices = @transform_2, window_bounds = array<i64: 1, 3, 1>}, {pipeline_mode = #tpu.pipeline_mode<synchronous>, transform_indices = @transform_3, window_bounds = array<i64: 3, 10>}, {pipeline_mode = #tpu.pipeline_mode<synchronous>, transform_indices = @transform_4, window_bounds = array<i64: 3, 10>}, {transform_indices = @transform_5, window_bounds = array<i64: 1, 3, 128>}]} {
    %c0 = arith.constant 0 : index
    %c0_0 = arith.constant 0 : index
    %0 = vector.load %arg5[%c0, %c0_0] : memref<3x10xbf16, #tpu.memory_space<vmem>>, vector<3x10xbf16>
    %c0_1 = arith.constant 0 : index
    %c0_2 = arith.constant 0 : index
    %c0_3 = arith.constant 0 : index
    %1 = vector.load %arg2[%c0_1, %c0_2, %c0_3] : memref<1x10x128xbf16, #tpu.memory_space<vmem>>, vector<1x10x128xbf16>
    %2 = vector.shape_cast %1 : vector<1x10x128xbf16> to vector<10x128xbf16>
    %cst = arith.constant dense<0.000000e+00> : vector<3x128xf32>
    %3 = tpu.matmul %0, %2, %cst {dimension_numbers = #tpu.dot_dimension_numbers<[1], [0], [0], [1], [0, 0, 1, 1], [], []>} : vector<3x10xbf16>, vector<10x128xbf16>, vector<3x128xf32> -> vector<3x128xf32>
    %c0_4 = arith.constant 0 : index
    %c0_5 = arith.constant 0 : index
    %c0_6 = arith.constant 0 : index
    %4 = vector.load %arg3[%c0_4, %c0_5, %c0_6] : memref<1x1x128xi32, #tpu.memory_space<vmem>>, vector<1x1x128xi32>
    %5 = vector.shape_cast %4 : vector<1x1x128xi32> to vector<1x128xi32>
    %6 = tpu.iota {dimensions = array<i32: 0>} : vector<10x128xi32>
    %7 = vector.broadcast %5 : vector<1x128xi32> to vector<10x128xi32>
    %8 = arith.cmpi eq, %6, %7 : vector<10x128xi32>
    %9 = arith.extui %8 : vector<10x128xi1> to vector<10x128xi32>
    %10 = arith.sitofp %9 : vector<10x128xi32> to vector<10x128xf32>
    %11 = arith.truncf %10 : vector<10x128xf32> to vector<10x128xbf16>
    %c0_7 = arith.constant 0 : index
    %c0_8 = arith.constant 0 : index
    %12 = vector.load %arg6[%c0_7, %c0_8] : memref<3x10xbf16, #tpu.memory_space<vmem>>, vector<3x10xbf16>
    %cst_9 = arith.constant dense<0.000000e+00> : vector<3x128xf32>
    %13 = tpu.matmul %12, %11, %cst_9 {dimension_numbers = #tpu.dot_dimension_numbers<[1], [0], [0], [1], [0, 0, 1, 1], [], []>} : vector<3x10xbf16>, vector<10x128xbf16>, vector<3x128xf32> -> vector<3x128xf32>
    %14 = arith.addf %3, %13 : vector<3x128xf32>
    %c0_10 = arith.constant 0 : index
    %c0_11 = arith.constant 0 : index
    %c0_12 = arith.constant 0 : index
    %15 = vector.load %arg4[%c0_10, %c0_11, %c0_12] : memref<1x3x1xf32, #tpu.memory_space<vmem>>, vector<1x3x1xf32>
    %16 = vector.shape_cast %15 : vector<1x3x1xf32> to vector<3x1xf32>
    %17 = vector.broadcast %16 : vector<3x1xf32> to vector<3x128xf32>
    %18 = arith.addf %14, %17 : vector<3x128xf32>
    %c0_13 = arith.constant 0 : index
    %c0_14 = arith.constant 0 : index
    %c0_15 = arith.constant 0 : index
    %19 = vector.load %arg7[%c0_13, %c0_14, %c0_15] : memref<1x3x128xf32, #tpu.memory_space<vmem>>, vector<1x3x128xf32>
    %20 = vector.shape_cast %19 : vector<1x3x128xf32> to vector<3x128xf32>
    %21 = vector.shape_cast %18 : vector<3x128xf32> to vector<1x3x128xf32>
    tpu.vector_store %arg7[%c0_13, %c0_14, %c0_15], %21 {strides = array<i32>} : memref<1x3x128xf32, #tpu.memory_space<vmem>>, vector<1x3x128xf32>,
    return
  }
  func.func @transform_0(%arg0: i32, %arg1: i32) -> (i32, i32, i32) {
    %c0_i32 = arith.constant 0 : i32
    %c0_i32_0 = arith.constant 0 : i32
    return %arg0, %c0_i32, %arg1 : i32, i32, i32
  }
  func.func @transform_1(%arg0: i32, %arg1: i32) -> (i32, i32, i32) {
    %c0_i32 = arith.constant 0 : i32
    %c0_i32_0 = arith.constant 0 : i32
    return %arg0, %c0_i32, %arg1 : i32, i32, i32
  }
  func.func @transform_2(%arg0: i32, %arg1: i32) -> (i32, i32, i32) {
    %c0_i32 = arith.constant 0 : i32
    %c0_i32_0 = arith.constant 0 : i32
    %c0_i32_1 = arith.constant 0 : i32
    return %arg0, %c0_i32, %c0_i32_0 : i32, i32, i32
  }
  func.func @transform_3(%arg0: i32, %arg1: i32) -> (i32, i32) {
    %c0_i32 = arith.constant 0 : i32
    %c0_i32_0 = arith.constant 0 : i32
    %c0_i32_1 = arith.constant 0 : i32
    return %c0_i32, %c0_i32_0 : i32, i32
  }
  func.func @transform_4(%arg0: i32, %arg1: i32) -> (i32, i32) {
    %c0_i32 = arith.constant 0 : i32
    %c0_i32_0 = arith.constant 0 : i32
    %c0_i32_1 = arith.constant 0 : i32
    return %c0_i32, %c0_i32_0 : i32, i32
  }
  func.func @transform_5(%arg0: i32, %arg1: i32) -> (i32, i32, i32) {
    %c0_i32 = arith.constant 0 : i32
    %c0_i32_0 = arith.constant 0 : i32
    return %arg0, %c0_i32, %arg1 : i32, i32, i32
  }
}

</mosaic_0001>

<llo_original>
// kernel: tpu_custom_call.1
$region0: #{tpu_custom_call.1}
  #allocation0 [shape = 'u32[]', space=smem, size = 0x4, offset = 0x4, fixed_abs, tag = 'smem constant byte address 0x4 - core index']
  #allocation1 [shape = 'u32[144,128]{1,0:T(1,128)}', space=vmem, size = 0x12000, scoped, tag = 'internal scratch']
  %s0 = inlined_call_operand.vmem [shape: bf16[2,10,128], index: 0, kind: input, shape index: {}]
  %s1 = inlined_call_operand.vmem [shape: s32[2,1,128], index: 1, kind: input, shape index: {}]
  %s2 = inlined_call_operand.vmem [shape: f32[2,3,1], index: 2, kind: input, shape index: {}]
  %s3 = inlined_call_operand.vmem [shape: bf16[3,10], index: 3, kind: input, shape index: {}]
  %s4 = inlined_call_operand.vmem [shape: bf16[3,10], index: 4, kind: input, shape index: {}]
  %s5 = inlined_call_operand.vmem [shape: f32[2,3,128], index: 5, kind: output, shape index: {}]
  %s6 = sld [smem:[#allocation0]]
  $region53: #{tpu_custom_call.1} parent=0
    _
  %s8 = ssub.s32 1, %s6
  %s9 = scalar_select 0, %s8, %s6
  loop: start=0, step=1, limit=4
  $region2: #{tpu_custom_call.1} parent=0 // loop_pre_header
    _
  $region3: #{tpu_custom_call.1} parent=0 // loop_header
    %s11 = sphi 0, %s15
    %p12 = scmp.ge.s32.totalorder %s11, 4
    %s18 = sphi 0, %s30
    %s19 = sphi 0, %s26
    %s20 = sphi 0, %s18
    %s21 = sphi 0, %s19
    %s22 = sphi 0, %s20
    %s23 = sphi 0, %s21
    %s35 = sphi 0, %s37
    %s38 = sphi 0, %s35
    %s39 = sphi 0, %s38
    %s55 = sphi 0, %s39
    %s63 = sphi 0, %s65
    %s66 = sphi 0, %s63
    %s67 = sphi 0, %s66
    %s83 = sphi 0, %s67
    %s89 = sphi 0, %s91
    %s92 = sphi 0, %s89
    %s93 = sphi 0, %s92
    %s109 = sphi 0, %s93
    %s113 = sphi 0, %s113
    %s115 = sphi 0, %s113
    %s116 = sphi 0, %s115
    %s130 = sphi 0, %s116
    %s134 = sphi 0, %s134
    %s136 = sphi 0, %s134
    %s137 = sphi 0, %s136
    %s151 = sphi 0, %s137
    %s159 = sphi 0, %s161
    %s162 = sphi 0, %s159
    %s163 = sphi 0, %s162
    %s179 = sphi 0, %s163
  $region4: #{tpu_custom_call.1} parent=0 // loop_header_branch
    %14 = sbr.rel (%p12) target = $region8
  $region5: #{tpu_custom_call.1} parent=0 // loop_body
    %s16 = ssub.s32 %s11, 1
    %s17 = ssub.s32 %s11, 2
    %s24 = sadd.s32 1, %s19
    %p25 = scmp.ge.s32.totalorder %s24, 1
    %s26 = scalar_select %p25, 0, %s24
    %s27 = sadd.s32 1, %s18
    %s28 = scalar_select %p25, %s27, %s18
    %p29 = scmp.ge.s32.totalorder %s28, 2
    %s30 = scalar_select %p29, 0, %s28
    %s31 = ssub.s32 %s18, %s30
    %s32 = ssub.s32 %s19, %s26
    %s33 = sor.u32 %s31, %s32
    %p34 = scmp.eq.s32.totalorder %s33, 0
    %s36 = sadd.s32 %s35, 1
    %s37 = scalar_select %p34, %s35, %s36
    %p40 = pneg %p34
    %p41 = scmp.eq.s32.totalorder %s11, 1
    %p42 = por %p40, %p41
    %p43 = scmp.ne.s32.totalorder %s35, %s38
    %p44 = scmp.eq.s32.totalorder %s11, 0
    %p45 = por %p43, %p44
    %p46 = scmp.ne.s32.totalorder %s35, %s38
    %p47 = scmp.eq.s32.totalorder %s16, 1
    %p48 = por %p46, %p47
    %p49 = scmp.ne.s32.totalorder %s38, %s39
    %p50 = scmp.eq.s32.totalorder %s16, 0
    %p51 = por %p49, %p50
    %p52 = scmp.ne.s32.totalorder %s38, %s39
    %p53 = scmp.eq.s32.totalorder %s17, 1
    %p54 = por %p52, %p53
    %p56 = scmp.ne.s32.totalorder %s39, %s55
    %p57 = scmp.eq.s32.totalorder %s17, 0
    %p58 = por %p56, %p57
    %s59 = ssub.s32 %s18, %s30
    %s60 = ssub.s32 %s19, %s26
    %s61 = sor.u32 %s59, %s60
    %p62 = scmp.eq.s32.totalorder %s61, 0
    %s64 = sadd.s32 %s63, 1
    %s65 = scalar_select %p62, %s63, %s64
    %p68 = pneg %p62
    %p69 = scmp.eq.s32.totalorder %s11, 1
    %p70 = por %p68, %p69
    %p71 = scmp.ne.s32.totalorder %s63, %s66
    %p72 = scmp.eq.s32.totalorder %s11, 0
    %p73 = por %p71, %p72
    %p74 = scmp.ne.s32.totalorder %s63, %s66
    %p75 = scmp.eq.s32.totalorder %s16, 1
    %p76 = por %p74, %p75
    %p77 = scmp.ne.s32.totalorder %s66, %s67
    %p78 = scmp.eq.s32.totalorder %s16, 0
    %p79 = por %p77, %p78
    %p80 = scmp.ne.s32.totalorder %s66, %s67
    %p81 = scmp.eq.s32.totalorder %s17, 1
    %p82 = por %p80, %p81
    %p84 = scmp.ne.s32.totalorder %s67, %s83
    %p85 = scmp.eq.s32.totalorder %s17, 0
    %p86 = por %p84, %p85
    %s87 = ssub.s32 %s18, %s30
    %p88 = scmp.eq.s32.totalorder %s87, 0
    %s90 = sadd.s32 %s89, 1
    %s91 = scalar_select %p88, %s89, %s90
    %p94 = pneg %p88
    %p95 = scmp.eq.s32.totalorder %s11, 1
    %p96 = por %p94, %p95
    %p97 = scmp.ne.s32.totalorder %s89, %s92
    %p98 = scmp.eq.s32.totalorder %s11, 0
    %p99 = por %p97, %p98
    %p100 = scmp.ne.s32.totalorder %s89, %s92
    %p101 = scmp.eq.s32.totalorder %s16, 1
    %p102 = por %p100, %p101
    %p103 = scmp.ne.s32.totalorder %s92, %s93
    %p104 = scmp.eq.s32.totalorder %s16, 0
    %p105 = por %p103, %p104
    %p106 = scmp.ne.s32.totalorder %s92, %s93
    %p107 = scmp.eq.s32.totalorder %s17, 1
    %p108 = por %p106, %p107
    %p110 = scmp.ne.s32.totalorder %s93, %s109
    %p111 = scmp.eq.s32.totalorder %s17, 0
    %p112 = por %p110, %p111
    %s114 = sadd.s32 %s113, 1
    %p117 = scmp.eq.s32.totalorder %s11, 1
    %p118 = scmp.ne.s32.totalorder %s113, %s115
    %p119 = scmp.eq.s32.totalorder %s11, 0
    %p120 = por %p118, %p119
    %p121 = scmp.ne.s32.totalorder %s113, %s115
    %p122 = scmp.eq.s32.totalorder %s16, 1
    %p123 = por %p121, %p122
    %p124 = scmp.ne.s32.totalorder %s115, %s116
    %p125 = scmp.eq.s32.totalorder %s16, 0
    %p126 = por %p124, %p125
    %p127 = scmp.ne.s32.totalorder %s115, %s116
    %p128 = scmp.eq.s32.totalorder %s17, 1
    %p129 = por %p127, %p128
    %p131 = scmp.ne.s32.totalorder %s116, %s130
    %p132 = scmp.eq.s32.totalorder %s17, 0
    %p133 = por %p131, %p132
    %s135 = sadd.s32 %s134, 1
    %p138 = scmp.eq.s32.totalorder %s11, 1
    %p139 = scmp.ne.s32.totalorder %s134, %s136
    %p140 = scmp.eq.s32.totalorder %s11, 0
    %p141 = por %p139, %p140
    %p142 = scmp.ne.s32.totalorder %s134, %s136
    %p143 = scmp.eq.s32.totalorder %s16, 1
    %p144 = por %p142, %p143
    %p145 = scmp.ne.s32.totalorder %s136, %s137
    %p146 = scmp.eq.s32.totalorder %s16, 0
    %p147 = por %p145, %p146
    %p148 = scmp.ne.s32.totalorder %s136, %s137
    %p149 = scmp.eq.s32.totalorder %s17, 1
    %p150 = por %p148, %p149
    %p152 = scmp.ne.s32.totalorder %s137, %s151
    %p153 = scmp.eq.s32.totalorder %s17, 0
    %p154 = por %p152, %p153
    %s155 = ssub.s32 %s18, %s30
    %s156 = ssub.s32 %s19, %s26
    %s157 = sor.u32 %s155, %s156
    %p158 = scmp.eq.s32.totalorder %s157, 0
    %s160 = sadd.s32 %s159, 1
    %s161 = scalar_select %p158, %s159, %s160
    %p164 = pneg %p158
    %p165 = scmp.eq.s32.totalorder %s11, 1
    %p166 = por %p164, %p165
    %p167 = scmp.ne.s32.totalorder %s159, %s162
    %p168 = scmp.eq.s32.totalorder %s11, 0
    %p169 = por %p167, %p168
    %p170 = scmp.ne.s32.totalorder %s159, %s162
    %p171 = scmp.eq.s32.totalorder %s16, 1
    %p172 = por %p170, %p171
    %p173 = scmp.ne.s32.totalorder %s162, %s163
    %p174 = scmp.eq.s32.totalorder %s16, 0
    %p175 = por %p173, %p174
    %p176 = scmp.ne.s32.totalorder %s162, %s163
    %p177 = scmp.eq.s32.totalorder %s17, 1
    %p178 = por %p176, %p177
    %p180 = scmp.ne.s32.totalorder %s163, %s179
    %p181 = scmp.eq.s32.totalorder %s17, 0
    %p182 = por %p180, %p181
    %p183 = scmp.le.s32.totalorder 1, %s11
    %p184 = scmp.lt.s32.totalorder %s11, 3
    %p185 = pnand %p183, %p184
    %p186 = pneg %p185
    // Predicated region
    $region9: #{tpu_custom_call.1} parent=5 // pred_check
      _
    $region10: #{tpu_custom_call.1} parent=5 // pred_check_branch
      %188 = sbr.rel (%p185) target = $region12
    $region11: #{tpu_custom_call.1} parent=5 // pred_region
      %s189 = ssub.s32 %s11, 1
      // Predicated region
      $region13: #{tpu_custom_call.1} parent=11 // pred_check
        %p190 = pneg %p126
      $region14: #{tpu_custom_call.1} parent=11 // pred_check_branch
        %192 = sbr.rel (%p190) target = $region16
      $region15: #{tpu_custom_call.1} parent=11 // pred_region
        _
      $region16: #{tpu_custom_call.1} parent=11 // pred_fallthru
        _
      // Predicated region
      $region17: #{tpu_custom_call.1} parent=11 // pred_check
        %p193 = pneg %p147
      $region18: #{tpu_custom_call.1} parent=11 // pred_check_branch
        %195 = sbr.rel (%p193) target = $region20
      $region19: #{tpu_custom_call.1} parent=11 // pred_region
        _
      $region20: #{tpu_custom_call.1} parent=11 // pred_fallthru
        _
    $region12: #{tpu_custom_call.1} parent=5 // pred_fallthru
      _
    %p196 = scmp.lt.s32.totalorder %s11, 2
    // Predicated region
    $region21: #{tpu_custom_call.1} parent=5 // pred_check
      %p197 = pneg %p196
    $region22: #{tpu_custom_call.1} parent=5 // pred_check_branch
      %199 = sbr.rel (%p197) target = $region24
    $region23: #{tpu_custom_call.1} parent=5 // pred_region
      // Predicated region
      $region25: #{tpu_custom_call.1} parent=23 // pred_check
        %p200 = pneg %p45
      $region26: #{tpu_custom_call.1} parent=23 // pred_check_branch
        %202 = sbr.rel (%p200) target = $region28
      $region27: #{tpu_custom_call.1} parent=23 // pred_region
        %p203 = scmp.lt.s32.totalorder %s18, 1
        %s204 = scalar_select %p203, %s18, 1
        %p205 = scmp.lt.s32.totalorder %s19, 0
        %s206 = scalar_select %p205, %s19, 0
        %s207 = smul.addr %s204, 2
        %s208 = sadd.s32 %s206, %s207
        %s209 = smul.addr %s208, 4
        %s210 = scalar_lea.vmem %s0, %s209
      $region28: #{tpu_custom_call.1} parent=23 // pred_fallthru
        _
      // Predicated region
      $region29: #{tpu_custom_call.1} parent=23 // pred_check
        %p211 = pneg %p73
      $region30: #{tpu_custom_call.1} parent=23 // pred_check_branch
        %213 = sbr.rel (%p211) target = $region32
      $region31: #{tpu_custom_call.1} parent=23 // pred_region
        %p214 = scmp.lt.s32.totalorder %s18, 1
        %s215 = scalar_select %p214, %s18, 1
        %p216 = scmp.lt.s32.totalorder %s19, 0
        %s217 = scalar_select %p216, %s19, 0
        %s218 = sadd.s32 %s217, %s215
        %s219 = scalar_lea.vmem %s1, %s218
      $region32: #{tpu_custom_call.1} parent=23 // pred_fallthru
        _
      // Predicated region
      $region33: #{tpu_custom_call.1} parent=23 // pred_check
        %p220 = pneg %p99
      $region34: #{tpu_custom_call.1} parent=23 // pred_check_branch
        %222 = sbr.rel (%p220) target = $region36
      $region35: #{tpu_custom_call.1} parent=23 // pred_region
        %p223 = scmp.lt.s32.totalorder %s18, 1
        %s224 = scalar_select %p223, %s18, 1
        %s225 = smul.addr %s224, 4
        %s226 = scalar_lea.vmem %s2, %s225
      $region36: #{tpu_custom_call.1} parent=23 // pred_fallthru
        _
    $region24: #{tpu_custom_call.1} parent=5 // pred_fallthru
      _
    %p227 = scmp.le.s32.totalorder 1, %s11
    %p228 = scmp.lt.s32.totalorder %s11, 3
    %p229 = pnand %p227, %p228
    %p230 = pneg %p229
    // Predicated region
    $region37: #{tpu_custom_call.1} parent=5 // pred_check
      _
    $region38: #{tpu_custom_call.1} parent=5 // pred_check_branch
      %232 = sbr.rel (%p229) target = $region40
    $region39: #{tpu_custom_call.1} parent=5 // pred_region
      %s233 = ssub.s32 %s11, 1
      %p234 = scmp.lt.s32.totalorder %s20, 1
      %s235 = scalar_select %p234, %s20, 1
      %p236 = scmp.lt.s32.totalorder %s21, 0
      %s237 = scalar_select %p236, %s21, 0
      %s238 = smul.addr %s235, 2
      %s239 = sadd.s32 %s237, %s238
      %s240 = smul.addr %s239, 4
      %s241 = scalar_lea.vmem %s0, %s240
      %p242 = pneg %p51
      %p243 = pneg %p48
      %p244 = scmp.lt.s32.totalorder %s20, 1
      %s245 = scalar_select %p244, %s20, 1
      %p246 = scmp.lt.s32.totalorder %s21, 0
      %s247 = scalar_select %p246, %s21, 0
      %s248 = sadd.s32 %s247, %s245
      %s249 = scalar_lea.vmem %s1, %s248
      %p250 = pneg %p79
      %p251 = pneg %p76
      %p252 = scmp.lt.s32.totalorder %s20, 1
      %s253 = scalar_select %p252, %s20, 1
      %s254 = smul.addr %s253, 4
      %s255 = scalar_lea.vmem %s2, %s254
      %p256 = pneg %p105
      %p257 = pneg %p102
      %p258 = pneg %p126
      %p259 = pneg %p123
      %p260 = pneg %p147
      %p261 = pneg %p144
      %p262 = pneg %p175
      %p263 = pneg %p172
      %p264 = scmp.lt.s32.totalorder %s20, 1
      %s265 = scalar_select %p264, %s20, 1
      %p266 = scmp.lt.s32.totalorder %s21, 0
      %s267 = scalar_select %p266, %s21, 0
      %s268 = sadd.s32 %s267, %s265
      %s269 = smul.addr %s268, 4
      %s270 = scalar_lea.vmem %s5, %s269
      %p271 = scmp.lt.s32.totalorder %s20, 1
      %s272 = scalar_select %p271, %s20, 1
      %p273 = scmp.lt.s32.totalorder %s21, 0
      %s274 = scalar_select %p273, %s21, 0
      %s275 = smul.addr %s272, 2
      %s276 = sadd.s32 %s274, %s275
      %s277 = smul.addr %s276, 4
      %s278 = scalar_lea.vmem %s0, %s277
      %p279 = scmp.lt.s32.totalorder %s20, 1
      %s280 = scalar_select %p279, %s20, 1
      %p281 = scmp.lt.s32.totalorder %s21, 0
      %s282 = scalar_select %p281, %s21, 0
      %s283 = sadd.s32 %s282, %s280
      %s284 = scalar_lea.vmem %s1, %s283
      %p285 = scmp.lt.s32.totalorder %s20, 1
      %s286 = scalar_select %p285, %s20, 1
      %s287 = smul.addr %s286, 4
      %s288 = scalar_lea.vmem %s2, %s287
      %p289 = scmp.lt.s32.totalorder %s20, 1
      %s290 = scalar_select %p289, %s20, 1
      %p291 = scmp.lt.s32.totalorder %s21, 0
      %s292 = scalar_select %p291, %s21, 0
      %s293 = sadd.s32 %s292, %s290
      %s294 = smul.addr %s293, 4
      %s295 = scalar_lea.vmem %s5, %s294
      %v297 = vld [vmem:[%s3] sm:$0x3]
      %v298 = vld [vmem:[%s278] sm:$0xf]
      %v299 = vld [vmem:[%s278 + $0x4] sm:$0x1]
      %v300 = vld [vmem:[%s284] sm:$0x1]
      %v301 = vlaneseq
      %v302 = vshrl.u32 %v301, 7
      %v303 = vadd.s32 %v302, 8
      %v304 = vlaneseq
      %v305 = vshrl.u32 %v304, 7
      %v306 = vsub.s32 0, %v305
      %v307 = vrot.slane %v300, %v306
      %vm308 = vcmp.eq.s32.totalorder %v302, %v307
      %vm309 = vcmp.eq.s32.totalorder %v303, %v307
      %v310 = vsel %vm308, 1, 0
      %v311 = vsel %vm309, 1, 0
      %v312 = vcvt.s32.f32 %v310
      %v313 = vcvt.s32.f32 %v311
      %v314 = vpack.c.bf16 %v313, %v312
      %v315 = vld [vmem:[%s4] sm:$0x3]
      %vm316 = vcmask 80896
      %v318 = vsel %vm316, %v315, 0
      %vm320 = vcmask 1044480
      %v322 = vsel %vm320, %v314, 0
      %324 = vmatprep.subr.bf16.mxu0 0
      %325 = vmatpush1.bf16.msra.mxu0 %v322
      %326 = vmatprep.subr.bf16.mxu0 0
      %327 = vmatpush1.bf16.msra.mxu0 0
      %328 = vmatprep.subr.bf16.mxu0 0
      %329 = vmatpush1.bf16.msra.mxu0 0
      %330 = vmatprep.subr.bf16.mxu0 0
      %331 = vmatpush1.bf16.msra.mxu0 0
      %332 = vmatprep.subr.bf16.mxu0 0
      %333 = vmatpush1.bf16.msra.mxu0 0
      %334 = vmatprep.subr.bf16.mxu0 0
      %335 = vmatpush1.bf16.msra.mxu0 0
      %336 = vmatprep.subr.bf16.mxu0 0
      %337 = vmatpush1.bf16.msra.mxu0 0
      %338 = vmatprep.subr.bf16.mxu0 0
      %339 = vmatpush1.bf16.msra.mxu0 0
      %340 = vmatprep.subr.bf16.mxu0 0
      %341 = vmatpush1.bf16.msra.mxu0 0
      %342 = vmatprep.subr.bf16.mxu0 0
      %343 = vmatpush1.bf16.msra.mxu0 0
      %344 = vmatprep.subr.bf16.mxu0 0
      %345 = vmatpush1.bf16.msra.mxu0 0
      %346 = vmatprep.subr.bf16.mxu0 0
      %347 = vmatpush1.bf16.msra.mxu0 0
      %348 = vmatprep.subr.bf16.mxu0 0
      %349 = vmatpush1.bf16.msra.mxu0 0
      %350 = vmatprep.subr.bf16.mxu0 0
      %351 = vmatpush1.bf16.msra.mxu0 0
      %352 = vmatprep.subr.bf16.mxu0 0
      %353 = vmatpush1.bf16.msra.mxu0 0
      %354 = vmatprep.subr.bf16.mxu0 0
      %355 = vmatpush1.bf16.msra.mxu0 0
      %356 = vmatprep.mubr.bf16.mxu0 0
      %357 = vmatmul.mubr.bf16.gmra.mrb[0].mxu0 %v318
      %v358 = vpop.f32.mrb[0].mxu0
      %v359 = vadd.f32 0.0, %v358
      %v360 = vpop.f32.mrb[0].mxu0
      %v361 = vpop.f32.mrb[0].mxu0
      %v362 = vpop.f32.mrb[0].mxu0
      %363 = vdwg.mxu0
      %v366 = vunpack.c.l.b16 %v298
      %v367 = vunpack.c.l.b16 %v299
      %v368 = vpack.c.b16 %v367, %v366
      %v370 = vsel %vm316, %v297, 0
      %v373 = vsel %vm320, %v368, 0
      %375 = vmatprep.subr.bf16.mxu0 0
      %376 = vmatpush1.bf16.msra.mxu0 %v373
      %377 = vmatprep.subr.bf16.mxu0 0
      %378 = vmatpush1.bf16.msra.mxu0 0
      %379 = vmatprep.subr.bf16.mxu0 0
      %380 = vmatpush1.bf16.msra.mxu0 0
      %381 = vmatprep.subr.bf16.mxu0 0
      %382 = vmatpush1.bf16.msra.mxu0 0
      %383 = vmatprep.subr.bf16.mxu0 0
      %384 = vmatpush1.bf16.msra.mxu0 0
      %385 = vmatprep.subr.bf16.mxu0 0
      %386 = vmatpush1.bf16.msra.mxu0 0
      %387 = vmatprep.subr.bf16.mxu0 0
      %388 = vmatpush1.bf16.msra.mxu0 0
      %389 = vmatprep.subr.bf16.mxu0 0
      %390 = vmatpush1.bf16.msra.mxu0 0
      %391 = vmatprep.subr.bf16.mxu0 0
      %392 = vmatpush1.bf16.msra.mxu0 0
      %393 = vmatprep.subr.bf16.mxu0 0
      %394 = vmatpush1.bf16.msra.mxu0 0
      %395 = vmatprep.subr.bf16.mxu0 0
      %396 = vmatpush1.bf16.msra.mxu0 0
      %397 = vmatprep.subr.bf16.mxu0 0
      %398 = vmatpush1.bf16.msra.mxu0 0
      %399 = vmatprep.subr.bf16.mxu0 0
      %400 = vmatpush1.bf16.msra.mxu0 0
      %401 = vmatprep.subr.bf16.mxu0 0
      %402 = vmatpush1.bf16.msra.mxu0 0
      %403 = vmatprep.subr.bf16.mxu0 0
      %404 = vmatpush1.bf16.msra.mxu0 0
      %405 = vmatprep.subr.bf16.mxu0 0
      %406 = vmatpush1.bf16.msra.mxu0 0
      %407 = vmatprep.mubr.bf16.mxu0 0
      %408 = vmatmul.mubr.bf16.gmra.mrb[0].mxu0 %v370
      %v409 = vpop.f32.mrb[0].mxu0
      %v410 = vadd.f32 %v359, %v409
      %v411 = vpop.f32.mrb[0].mxu0
      %v412 = vpop.f32.mrb[0].mxu0
      %v413 = vpop.f32.mrb[0].mxu0
      %414 = vdwg.mxu0
      %v415 = vld [vmem:[%s288] sm:$0x7]
      %417 = vset.pattern.permute.xlu0 0
      %418 = vperm.xlu0 %417, %v415
      %v419 = vpop.permute.xlu0 %418
      %v421 = vadd.f32 %v410, %v419
      %422 = vst [vmem:[%s295] sm:$0x7] %v421
      %p423 = scmp.lt.s32.totalorder %s20, 1
      %s424 = scalar_select %p423, %s20, 1
      %p425 = scmp.lt.s32.totalorder %s21, 0
      %s426 = scalar_select %p425, %s21, 0
      %s427 = sadd.s32 %s426, %s424
      %s428 = smul.addr %s427, 4
      %s429 = scalar_lea.vmem %s5, %s428
      // Predicated region
      $region41: #{tpu_custom_call.1} parent=39 // pred_check
        %p430 = pneg %p172
      $region42: #{tpu_custom_call.1} parent=39 // pred_check_branch
        %432 = sbr.rel (%p430) target = $region44
      $region43: #{tpu_custom_call.1} parent=39 // pred_region
        _
      $region44: #{tpu_custom_call.1} parent=39 // pred_fallthru
        _
    $region40: #{tpu_custom_call.1} parent=5 // pred_fallthru
      _
    %p433 = scmp.le.s32.totalorder 2, %s11
    // Predicated region
    $region45: #{tpu_custom_call.1} parent=5 // pred_check
      %p434 = pneg %p433
    $region46: #{tpu_custom_call.1} parent=5 // pred_check_branch
      %436 = sbr.rel (%p434) target = $region48
    $region47: #{tpu_custom_call.1} parent=5 // pred_region
      %s437 = ssub.s32 %s11, 2
      // Predicated region
      $region49: #{tpu_custom_call.1} parent=47 // pred_check
        %p438 = pneg %p178
      $region50: #{tpu_custom_call.1} parent=47 // pred_check_branch
        %440 = sbr.rel (%p438) target = $region52
      $region51: #{tpu_custom_call.1} parent=47 // pred_region
        %p441 = scmp.lt.s32.totalorder %s22, 1
        %s442 = scalar_select %p441, %s22, 1
        %p443 = scmp.lt.s32.totalorder %s23, 0
        %s444 = scalar_select %p443, %s23, 0
        %s445 = sadd.s32 %s444, %s442
        %s446 = smul.addr %s445, 4
        %s447 = scalar_lea.vmem %s5, %s446
      $region52: #{tpu_custom_call.1} parent=47 // pred_fallthru
        _
    $region48: #{tpu_custom_call.1} parent=5 // pred_fallthru
      _
  $region6: #{tpu_custom_call.1} parent=0 // loop_footer
    %s15 = sadd.s32 1, %s11
  $region7: #{tpu_custom_call.1} parent=0 // loop_footer_branch
    %10 = sbr.rel target = $region3
  $region8: #{tpu_custom_call.1} parent=0 // loop_exit
    _

</llo_original>
